<compile_context>
chip_gen: v7x
topology: tpu7x:2x2x1
jax: 0.10.0
libtpu: 0.0.40
codegen_flags: <defaults>
</compile_context>

<pallas_src>
import functools
import math

import jax
import jax.numpy as jnp
from jax import lax
from jax.experimental import pallas as pl
from jax.experimental.pallas import tpu as pltpu


_LANE = 128
_MIN_BYTES_FOR_PALLAS = 4 * 1024 * 1024   # below this, fused XLA wins (setup overhead)
_HARD_MAX_TILE_M = 8192
_TARGET_M_BLOCKS = 8                      # >= 4 blocks per TensorCore on v7x
_MIN_X_TILE_BYTES = 512 * 1024            # keep per-step DMA large enough to amortize ~0.35us


def _round_up(x, m):
    return ((x + m - 1) // m) * m


def _sublane(itemsize):
    # f32 -> 8, bf16 -> 16, int8/fp8 -> 32 rows per (sublane, lane) tile.
    return max(8, 32 // max(int(itemsize), 1))


def _padded_bytes(rows, cols, itemsize):
    """Physical VMEM footprint of a logical (rows, cols) buffer after (8,128) tiling."""
    return _round_up(rows, _sublane(itemsize)) * _round_up(cols, _LANE) * itemsize


def _vmem_config():
    """Per-generation scoped-VMEM limit and tile working-set budget."""
    cap = 64 * 1024 * 1024  # safe fallback (v7x-sized)
    try:
        cap = int(getattr(pltpu.get_tpu_info(), "vmem_capacity_bytes", cap))
    except Exception:
        pass
    limit = min((cap * 3) // 4, 96 * 1024 * 1024)   # ~96 MiB v5e/v6e, ~48 MiB v7x
    budget = min(limit // 2, 32 * 1024 * 1024)      # ~32 MiB v5e/v6e, ~24 MiB v7x
    return budget, limit


def _pick_tiles(m, c_in, c_out, x_isize, w_isize, o_isize, budget, transposed):
    """Choose (tile_m, tile_n, tile_k); return None if nothing reasonable fits."""
    # K split only for deep reductions and only with a lane-aligned divisor
    # (avoids accumulating garbage from padded out-of-bounds K blocks).
    tile_k = c_in
    if c_in > 2048:
        for cand in (2048, 1024, 512, 256, 128):
            if c_in % cand == 0:
                tile_k = cand
                break

    # N tiling: keep the double-buffered weight panel within ~1/3 of the budget.
    def w_panel_bytes(tn):
        return 2 * _padded_bytes(tn, tile_k, w_isize)

    tile_n = c_out
    if w_panel_bytes(tile_n) > budget // 3:
        per_n_row = 2 * _round_up(tile_k, _LANE) * w_isize
        cand = (budget // 3) // max(per_n_row, 1)
        cand = max(_LANE, (cand // _LANE) * _LANE)
        tile_n = min(c_out, cand)
    if tile_n >= c_out:
        tile_n = c_out

    # Per-M-row VMEM cost, layout-aware (lane dims -> 128, sublane -> 8/16/32).
    x_row = _round_up(tile_k, _LANE) * x_isize
    if transposed:
        out_row = _round_up(tile_n, _sublane(o_isize)) * o_isize   # per lane column
        acc_row = _round_up(tile_n, _sublane(4)) * 4
        bias_bytes = 2 * _padded_bytes(tile_n, 1, w_isize)
        m_align = _LANE                         # tile_m is the lane dim of the output block
    else:
        out_row = _round_up(tile_n, _LANE) * o_isize
        acc_row = _round_up(tile_n, _LANE) * 4
        bias_bytes = 2 * _padded_bytes(1, tile_n, w_isize)
        m_align = _sublane(x_isize)

    per_row = 2 * x_row + 2 * out_row + acc_row
    avail = budget - w_panel_bytes(tile_n) - bias_bytes
    if avail <= per_row * m_align:
        return None

    tile_m_budget = avail // per_row
    # Balance bigger tiles (amortize per-step overhead) against enough M blocks
    # for double buffering + v7x megacore sharding of the "parallel" M axis.
    min_rows = _round_up(max(m_align, _MIN_X_TILE_BYTES // max(x_row, 1)), m_align)
    blocks_rows = _round_up(pl.cdiv(m, _TARGET_M_BLOCKS), m_align)
    tile_m = min(tile_m_budget, max(min_rows, blocks_rows), _HARD_MAX_TILE_M)
    if tile_m >= m:
        tile_m = m          # full extent is always a legal block size
    else:
        tile_m = max(m_align, (tile_m // m_align) * m_align)
    return tile_m, tile_n, tile_k


def _make_linear_kernel(transposed, k_split):
    """One (m, n) output tile of y = x @ W^T + b; optional K-split accumulation."""

    def _tile_dot(x_ref, w_ref):
        # Contract the shared c_in axis (dim 1 of both operands): the weight is
        # consumed in its native (c_out, c_in) layout; Mosaic lowers the
        # transposed-operand contraction natively on the MXU.
        if transposed:
            lhs, rhs = w_ref[...], x_ref[...]     # -> (tile_n, tile_m), lane-dense store
        else:
            lhs, rhs = x_ref[...], w_ref[...]     # -> (tile_m, tile_n)
        return lax.dot_general(
            lhs, rhs,
            dimension_numbers=(((1,), (1,)), ((), ())),
            preferred_element_type=jnp.float32)

    if not k_split:
        def kernel(x_ref, w_ref, b_ref, o_ref):
            acc = _tile_dot(x_ref, w_ref)
            o_ref[...] = (acc + b_ref[...].astype(jnp.float32)).astype(o_ref.dtype)
        return kernel

    def kernel(x_ref, w_ref, b_ref, o_ref, acc_ref):
        @pl.when(pl.program_id(2) == 0)
        def _init():
            acc_ref[...] = jnp.zeros_like(acc_ref)

        acc_ref[...] += _tile_dot(x_ref, w_ref)

        @pl.when(pl.program_id(2) == pl.num_programs(2) - 1)
        def _finalize():
            o_ref[...] = (acc_ref[...] + b_ref[...].astype(jnp.float32)).astype(o_ref.dtype)

    return kernel


@functools.partial(jax.jit, static_argnames=("force_pallas",))
def pinball_head_forward(x, weight, bias, *, force_pallas=False):
    """Pinball_head.forward: y = x @ weight.T + bias (PyTorch nn.Linear layout).

    Args:
      x:      (..., c_in)
      weight: (c_out, c_in)   -- NOT transposed
      bias:   (c_out,)
    Returns:
      (..., c_out)
    """
    c_in = x.shape[-1]
    c_out = weight.shape[0]
    lead = x.shape[:-1]
    m = int(math.prod(lead)) if lead else 1

    x_isize = x.dtype.itemsize
    w_isize = weight.dtype.itemsize

    total_bytes = (m * c_in * x_isize + c_out * c_in * w_isize
                   + c_out * w_isize + m * c_out * x_isize)

    def _xla_fallback():
        return x @ weight.T + bias

    # Tiny heads: let XLA fuse the GEMM + bias; a standalone kernel only adds overhead.
    if not force_pallas and (total_bytes < _MIN_BYTES_FOR_PALLAS or m < _LANE):
        return _xla_fallback()

    budget, vmem_limit = _vmem_config()
    transposed = (c_out % _LANE) != 0          # lane-dense output via (c_out, m) layout
    tiles = _pick_tiles(m, c_in, c_out, x_isize, w_isize, x_isize, budget, transposed)
    if tiles is None:
        return _xla_fallback()
    tile_m, tile_n, tile_k = tiles

    m_blocks = pl.cdiv(m, tile_m)
    n_blocks = pl.cdiv(c_out, tile_n)
    k_blocks = c_in // tile_k                  # tile_k always divides c_in
    k_split = k_blocks > 1

    x2 = x.reshape(m, c_in)

    if transposed:
        b2 = bias.reshape(c_out, 1)
        out_shape = jax.ShapeDtypeStruct((c_out, m), x.dtype)
        in_specs = [
            pl.BlockSpec((tile_m, tile_k), lambda i, j, k: (i, k)),   # x tile
            pl.BlockSpec((tile_n, tile_k), lambda i, j, k: (j, k)),   # weight panel
            pl.BlockSpec((tile_n, 1), lambda i, j, k: (j, 0)),        # bias column
        ]
        out_specs = pl.BlockSpec((tile_n, tile_m), lambda i, j, k: (j, i))
        acc_shape = (tile_n, tile_m)
    else:
        b2 = bias.reshape(1, c_out)
        out_shape = jax.ShapeDtypeStruct((m, c_out), x.dtype)
        in_specs = [
            pl.BlockSpec((tile_m, tile_k), lambda i, j, k: (i, k)),
            pl.BlockSpec((tile_n, tile_k), lambda i, j, k: (j, k)),
            pl.BlockSpec((1, tile_n), lambda i, j, k: (0, j)),
        ]
        out_specs = pl.BlockSpec((tile_m, tile_n), lambda i, j, k: (i, j))
        acc_shape = (tile_m, tile_n)

    scratch_shapes = [pltpu.VMEM(acc_shape, jnp.float32)] if k_split else []

    # Weight/bias blocks are re-streamed once per M block (K is the innermost axis).
    cost = pl.CostEstimate(
        flops=2 * m * c_in * c_out,
        transcendentals=0,
        bytes_accessed=(m * c_in * x_isize
                        + m_blocks * c_out * c_in * w_isize
                        + m_blocks * c_out * w_isize
                        + m * c_out * x_isize),
    )

    grid_spec = pltpu.PrefetchScalarGridSpec(
        num_scalar_prefetch=0,
        grid=(m_blocks, n_blocks, k_blocks),
        in_specs=in_specs,
        out_specs=out_specs,
        scratch_shapes=scratch_shapes,
    )

    out = pl.pallas_call(
        _make_linear_kernel(transposed, k_split),
        out_shape=out_shape,
        grid_spec=grid_spec,
        compiler_params=pltpu.CompilerParams(
            dimension_semantics=("parallel", "parallel", "arbitrary"),
            vmem_limit_bytes=vmem_limit,
        ),
        cost_estimate=cost,
    )(x2, weight, b2)

    if transposed:
        # (c_out, m) -> (m, c_out): touches only m*c_out elements, far cheaper than
        # masked 16/128-lane stores + narrow writeback DMAs inside the kernel.
        out = out.T
    return out.reshape(*lead, c_out)


if __name__ == "__main__":
    key = jax.random.PRNGKey(0)

    def make_case(case_key, lead, c_in, c_out):
        kx, kw, kb = jax.random.split(case_key, 3)
        xx = jax.random.normal(kx, (*lead, c_in), dtype=jnp.float32)
        bound = 1.0 / math.sqrt(c_in)
        ww = jax.random.uniform(kw, (c_out, c_in), minval=-bound, maxval=bound,
                                dtype=jnp.float32)
        bb = jax.random.uniform(kb, (c_out,), minval=-bound, maxval=bound,
                                dtype=jnp.float32)
        return xx, ww, bb

    cases = [
        # (lead, c_in, c_out, force_pallas)
        ((2, 64), 32, 16, True),       # tiny Pinball head, forced through the
                                       # transposed (lane-dense) Pallas path
        ((2, 64), 32, 16, False),      # same shape via heuristic -> XLA fallback
        ((4, 1024), 256, 128, False),  # standard-layout path, 8 M blocks, resident W
        ((2, 128), 4096, 16, False),   # deep reduction -> K-split accumulator path
    ]

    keys = jax.random.split(key, len(cases))
    for ck, (lead, c_in, c_out, force) in zip(keys, cases):
        x, w, b = make_case(ck, lead, c_in, c_out)
        out = jax.block_until_ready(pinball_head_forward(x, w, b, force_pallas=force))
        ref = x @ w.T + b
        assert out.shape == (*lead, c_out), (out.shape, lead, c_out)
        # Tolerance scales with the reduction depth to absorb f32-matmul pass-count
        # differences between the XLA reference and the Mosaic kernel.
        tol = max(1e-4, 2e-4 * math.sqrt(c_in))
        assert jnp.allclose(out, ref, atol=tol, rtol=tol), (
            lead, c_in, c_out, float(jnp.max(jnp.abs(out - ref))))

    print("KERNEL_OK")
</pallas_src>

<mosaic_0001>
module attributes {stable_mosaic.version = 11 : i64} {
  func.func @kernel(%arg0: i32, %arg1: i32, %arg2: i32, %arg3: memref<128x32xf32, #tpu.memory_space<vmem>>, %arg4: memref<16x32xf32, #tpu.memory_space<vmem>>, %arg5: memref<16x1xf32, #tpu.memory_space<vmem>>, %arg6: memref<16x128xf32, #tpu.memory_space<vmem>>) attributes {dimension_semantics = [#tpu.dimension_semantics<parallel>, #tpu.dimension_semantics<parallel>, #tpu.dimension_semantics<arbitrary>], iteration_bounds = array<i64: 1, 1, 1>, scalar_prefetch = 0 : i64, scratch_operands = 0 : i64, tpu.core_type = #tpu.core_type<tc>, window_params = [{transform_indices = @transform_0, window_bounds = array<i64: 128, 32>}, {transform_indices = @transform_1, window_bounds = array<i64: 16, 32>}, {transform_indices = @transform_2, window_bounds = array<i64: 16, 1>}, {transform_indices = @transform_3, window_bounds = array<i64: 16, 128>}]} {
    %c0 = arith.constant 0 : index
    %c0_0 = arith.constant 0 : index
    %0 = vector.load %arg4[%c0, %c0_0] : memref<16x32xf32, #tpu.memory_space<vmem>>, vector<16x32xf32>
    %c0_1 = arith.constant 0 : index
    %c0_2 = arith.constant 0 : index
    %1 = vector.load %arg3[%c0_1, %c0_2] : memref<128x32xf32, #tpu.memory_space<vmem>>, vector<128x32xf32>
    %cst = arith.constant dense<0.000000e+00> : vector<16x128xf32>
    %2 = tpu.matmul %0, %1, %cst {dimension_numbers = #tpu.dot_dimension_numbers<[1], [1], [0], [0], [0, 0, 1, 0], [], []>} : vector<16x32xf32>, vector<128x32xf32>, vector<16x128xf32> -> vector<16x128xf32>
    %c0_3 = arith.constant 0 : index
    %c0_4 = arith.constant 0 : index
    %3 = vector.load %arg5[%c0_3, %c0_4] : memref<16x1xf32, #tpu.memory_space<vmem>>, vector<16x1xf32>
    %4 = vector.broadcast %3 : vector<16x1xf32> to vector<16x128xf32>
    %5 = arith.addf %2, %4 : vector<16x128xf32>
    %c0_5 = arith.constant 0 : index
    %c0_6 = arith.constant 0 : index
    %6 = vector.load %arg6[%c0_5, %c0_6] : memref<16x128xf32, #tpu.memory_space<vmem>>, vector<16x128xf32>
    tpu.vector_store %arg6[%c0_5, %c0_6], %5 {strides = array<i32>} : memref<16x128xf32, #tpu.memory_space<vmem>>, vector<16x128xf32>,
    return
  }
  func.func @transform_0(%arg0: i32, %arg1: i32, %arg2: i32) -> (i32, i32) {
    %c0_i32 = arith.constant 0 : i32
    return %arg0, %arg2 : i32, i32
  }
  func.func @transform_1(%arg0: i32, %arg1: i32, %arg2: i32) -> (i32, i32) {
    %c0_i32 = arith.constant 0 : i32
    return %arg1, %arg2 : i32, i32
  }
  func.func @transform_2(%arg0: i32, %arg1: i32, %arg2: i32) -> (i32, i32) {
    %c0_i32 = arith.constant 0 : i32
    %c0_i32_0 = arith.constant 0 : i32
    return %arg1, %c0_i32 : i32, i32
  }
  func.func @transform_3(%arg0: i32, %arg1: i32, %arg2: i32) -> (i32, i32) {
    %c0_i32 = arith.constant 0 : i32
    return %arg1, %arg0 : i32, i32
  }
}

</mosaic_0001>

<llo_original>
// kernel: pinball_head_forward.1
$region0: #{pinball_head_forward.1}
  #allocation0 [shape = 'u32[]', space=smem, size = 0x4, offset = 0x4, fixed_abs, tag = 'smem constant byte address 0x4 - core index']
  #allocation1 [shape = 'u32[144,128]{1,0:T(1,128)}', space=vmem, size = 0x12000, scoped, tag = 'internal scratch']
  %s0 = inlined_call_operand.vmem [shape: f32[128,32], index: 0, kind: input, shape index: {}]
  %s1 = inlined_call_operand.vmem [shape: f32[16,32], index: 1, kind: input, shape index: {}]
  %s2 = inlined_call_operand.vmem [shape: f32[16,1], index: 2, kind: input, shape index: {}]
  %s3 = inlined_call_operand.vmem [shape: f32[16,128], index: 3, kind: output, shape index: {}]
  %s4 = sld [smem:[#allocation0]]
  $region22: #{pinball_head_forward.1} parent=0
    _
  %s6 = ssub.s32 1, %s4
  %s7 = scalar_select 0, %s6, %s4
  // Predicated region
  $region2: #{pinball_head_forward.1} parent=0 // pred_check
    _
  $region3: #{pinball_head_forward.1} parent=0 // pred_check_branch
    %9 = sbr.rel (0) target = $region5
  $region4: #{pinball_head_forward.1} parent=0 // pred_region
    _
  $region5: #{pinball_head_forward.1} parent=0 // pred_fallthru
    _
  // Predicated region
  $region6: #{pinball_head_forward.1} parent=0 // pred_check
    _
  $region7: #{pinball_head_forward.1} parent=0 // pred_check_branch
    %11 = sbr.rel (0) target = $region9
  $region8: #{pinball_head_forward.1} parent=0 // pred_region
    _
  $region9: #{pinball_head_forward.1} parent=0 // pred_fallthru
    _
  // Predicated region
  $region10: #{pinball_head_forward.1} parent=0 // pred_check
    _
  $region11: #{pinball_head_forward.1} parent=0 // pred_check_branch
    %13 = sbr.rel (0) target = $region13
  $region12: #{pinball_head_forward.1} parent=0 // pred_region
    _
  $region13: #{pinball_head_forward.1} parent=0 // pred_fallthru
    _
  %v14 = vld [vmem:[%s1] sm:$0xff]
  %v15 = vld [vmem:[%s1 + $0x8] sm:$0xff]
  %v16 = vld [vmem:[%s0] sm:$0xff]
  %v17 = vld [vmem:[%s0 + $0x8] sm:$0xff]
  %v18 = vld [vmem:[%s0 + $0x10] sm:$0xff]
  %v19 = vld [vmem:[%s0 + $0x18] sm:$0xff]
  %v20 = vld [vmem:[%s0 + $0x20] sm:$0xff]
  %v21 = vld [vmem:[%s0 + $0x28] sm:$0xff]
  %v22 = vld [vmem:[%s0 + $0x30] sm:$0xff]
  %v23 = vld [vmem:[%s0 + $0x38] sm:$0xff]
  %v24 = vld [vmem:[%s0 + $0x40] sm:$0xff]
  %v25 = vld [vmem:[%s0 + $0x48] sm:$0xff]
  %v26 = vld [vmem:[%s0 + $0x50] sm:$0xff]
  %v27 = vld [vmem:[%s0 + $0x58] sm:$0xff]
  %v28 = vld [vmem:[%s0 + $0x60] sm:$0xff]
  %v29 = vld [vmem:[%s0 + $0x68] sm:$0xff]
  %v30 = vld [vmem:[%s0 + $0x70] sm:$0xff]
  %v31 = vld [vmem:[%s0 + $0x78] sm:$0xff]
  %v32 = vld [vmem:[%s2] sm:$0xff]
  %v33 = vld [vmem:[%s2 + $0x8] sm:$0xff]
  %35 = vset.pattern.permute.xlu0 0
  %36 = vperm.xlu0 %35, %v32
  %v37 = vpop.permute.xlu0 %36
  %40 = vset.pattern.permute.xlu0 0
  %41 = vperm.xlu0 %40, %v33
  %v42 = vpop.permute.xlu0 %41
  %vm44 = vcmask 261120
  %v46 = vsel %vm44, %v14, 0
  %v49 = vsel %vm44, %v15, 0
  %v52 = vsel %vm44, %v16, 0
  %v55 = vsel %vm44, %v17, 0
  %v58 = vsel %vm44, %v18, 0
  %v61 = vsel %vm44, %v19, 0
  %v64 = vsel %vm44, %v20, 0
  %v67 = vsel %vm44, %v21, 0
  %v70 = vsel %vm44, %v22, 0
  %v73 = vsel %vm44, %v23, 0
  %v76 = vsel %vm44, %v24, 0
  %v79 = vsel %vm44, %v25, 0
  %v82 = vsel %vm44, %v26, 0
  %v85 = vsel %vm44, %v27, 0
  %v88 = vsel %vm44, %v28, 0
  %v91 = vsel %vm44, %v29, 0
  %v94 = vsel %vm44, %v30, 0
  %v97 = vsel %vm44, %v31, 0
  %99 = vmatprep.subr.mxu0 0.0
  %100 = vmatpush1.xpose.msra.mxu0 %v52
  %101 = vmatprep.subr.mxu0 0.0
  %102 = vmatpush1.xpose.msra.mxu0 %v55
  %103 = vmatprep.subr.mxu0 0.0
  %104 = vmatpush1.xpose.msra.mxu0 %v58
  %105 = vmatprep.subr.mxu0 0.0
  %106 = vmatpush1.xpose.msra.mxu0 %v61
  %107 = vmatprep.subr.mxu0 0.0
  %108 = vmatpush1.xpose.msra.mxu0 %v64
  %109 = vmatprep.subr.mxu0 0.0
  %110 = vmatpush1.xpose.msra.mxu0 %v67
  %111 = vmatprep.subr.mxu0 0.0
  %112 = vmatpush1.xpose.msra.mxu0 %v70
  %113 = vmatprep.subr.mxu0 0.0
  %114 = vmatpush1.xpose.msra.mxu0 %v73
  %115 = vmatprep.subr.mxu0 0.0
  %116 = vmatpush1.xpose.msra.mxu0 %v76
  %117 = vmatprep.subr.mxu0 0.0
  %118 = vmatpush1.xpose.msra.mxu0 %v79
  %119 = vmatprep.subr.mxu0 0.0
  %120 = vmatpush1.xpose.msra.mxu0 %v82
  %121 = vmatprep.subr.mxu0 0.0
  %122 = vmatpush1.xpose.msra.mxu0 %v85
  %123 = vmatprep.subr.mxu0 0.0
  %124 = vmatpush1.xpose.msra.mxu0 %v88
  %125 = vmatprep.subr.mxu0 0.0
  %126 = vmatpush1.xpose.msra.mxu0 %v91
  %127 = vmatprep.subr.mxu0 0.0
  %128 = vmatpush1.xpose.msra.mxu0 %v94
  %129 = vmatprep.subr.mxu0 0.0
  %130 = vmatpush1.xpose.msra.mxu0 %v97
  %131 = vmatprep.subr.mxu0 0.0
  %132 = vmatpush1.xpose.msra.mxu0 0.0
  %133 = vmatprep.subr.mxu0 0.0
  %134 = vmatpush1.xpose.msra.mxu0 0.0
  %135 = vmatprep.subr.mxu0 0.0
  %136 = vmatpush1.xpose.msra.mxu0 0.0
  %137 = vmatprep.subr.mxu0 0.0
  %138 = vmatpush1.xpose.msra.mxu0 0.0
  %139 = vmatprep.subr.mxu0 0.0
  %140 = vmatpush1.xpose.msra.mxu0 0.0
  %141 = vmatprep.subr.mxu0 0.0
  %142 = vmatpush1.xpose.msra.mxu0 0.0
  %143 = vmatprep.subr.mxu0 0.0
  %144 = vmatpush1.xpose.msra.mxu0 0.0
  %145 = vmatprep.subr.mxu0 0.0
  %146 = vmatpush1.xpose.msra.mxu0 0.0
  %147 = vmatprep.subr.mxu0 0.0
  %148 = vmatpush1.xpose.msra.mxu0 0.0
  %149 = vmatprep.subr.mxu0 0.0
  %150 = vmatpush1.xpose.msra.mxu0 0.0
  %151 = vmatprep.subr.mxu0 0.0
  %152 = vmatpush1.xpose.msra.mxu0 0.0
  %153 = vmatprep.subr.mxu0 0.0
  %154 = vmatpush1.xpose.msra.mxu0 0.0
  %155 = vmatprep.subr.mxu0 0.0
  %156 = vmatpush1.xpose.msra.mxu0 0.0
  %157 = vmatprep.subr.mxu0 0.0
  %158 = vmatpush1.xpose.msra.mxu0 0.0
  %159 = vmatprep.subr.mxu0 0.0
  %160 = vmatpush1.xpose.msra.mxu0 0.0
  %161 = vmatprep.subr.mxu0 0.0
  %162 = vmatpush1.xpose.msra.mxu0 0.0
  %163 = vmatprep.mubr.f32.mxu0 0.0
  %164 = vmatmul.mubr.f32.gmra.mrb[0].mxu0 %v46
  %v165 = vpop.f32.mrb[0].mxu0
  %v166 = vadd.f32 %v37, %v165
  %v167 = vpop.f32.mrb[0].mxu0
  %168 = vmatprep.mubr.f32.mxu0 0.0
  %169 = vmatmul.mubr.f32.gmra.mrb[0].mxu0 %v49
  %v170 = vpop.f32.mrb[0].mxu0
  %v171 = vadd.f32 %v42, %v170
  %v172 = vpop.f32.mrb[0].mxu0
  %173 = vdwg.mxu0
  %174 = vst [vmem:[%s3] sm:$0xff] %v166
  %175 = vst [vmem:[%s3 + $0x8] sm:$0xff] %v171
  // Predicated region
  $region14: #{pinball_head_forward.1} parent=0 // pred_check
    _
  $region15: #{pinball_head_forward.1} parent=0 // pred_check_branch
    %177 = sbr.rel (0) target = $region17
  $region16: #{pinball_head_forward.1} parent=0 // pred_region
    _
  $region17: #{pinball_head_forward.1} parent=0 // pred_fallthru
    _
  // Predicated region
  $region18: #{pinball_head_forward.1} parent=0 // pred_check
    _
  $region19: #{pinball_head_forward.1} parent=0 // pred_check_branch
    %179 = sbr.rel (0) target = $region21
  $region20: #{pinball_head_forward.1} parent=0 // pred_region
    _
  $region21: #{pinball_head_forward.1} parent=0 // pred_fallthru
    _

</llo_original>
